<compile_context>
chip_gen: v6e
topology: v6e:2x2x1
jax: 0.10.0
libtpu: 0.0.40
codegen_flags: <defaults>
</compile_context>

<pallas_src>
import math

import jax
import jax.numpy as jnp
from jax.experimental import pallas as pl
from jax.experimental.pallas import tpu as pltpu

HIDDEN = 256
LANES = 128  # packed Q values per output lane row


def _round_up(n, m):
    return (n + m - 1) // m * m


def _critic_kernel(x_ref, a_ref, w1x_ref, w1a_ref, b1_ref, w2_ref, b2_ref,
                   w3_ref, b3_ref, o_ref):
    # ---- Layer 1: bf16 operands on the MXU, f32 accumulation. ----
    # f32 -> bf16 casts happen in-kernel (VPU work hidden under MXU/DMA slack)
    # so the wrapper does not launch separate cast ops over HBM.
    # TODO(synk): the two K=obs / K=act dots could be fused into one K=obs+act
    # dot via an in-VMEM lane concat; kept split (tiny FLOPs, avoids relayout).
    h1 = jnp.dot(x_ref[...].astype(jnp.bfloat16), w1x_ref[...],
                 preferred_element_type=jnp.float32)
    h1 = h1 + jnp.dot(a_ref[...].astype(jnp.bfloat16), w1a_ref[...],
                      preferred_element_type=jnp.float32)
    h1 = jnp.maximum(h1 + b1_ref[...], 0.0)            # f32 elementwise (v5e-safe)

    # ---- Layer 2: (tB, 256) @ (256, 256), bf16 MXU / f32 acc. ----
    h2 = jnp.dot(h1.astype(jnp.bfloat16), w2_ref[...],
                 preferred_element_type=jnp.float32)
    h2 = jnp.maximum(h2 + b2_ref[...], 0.0)

    # ---- Layer 3 (N=1): VPU multiply + XLU lane reduction, packed store. ----
    rows = o_ref.shape[1]                               # tile_b // 128 (static)
    h2r = h2.reshape(rows, LANES, HIDDEN)               # leading-dim split: free
    q = jnp.sum(h2r * w3_ref[...], axis=-1) + b3_ref[0, 0]   # (rows, 128) f32
    o_ref[0] = q                                        # lane-dense packed output


def prepare_params(params, obs_dim):
    """One-time kernel-ready param prep (cache alongside params, NOT per call)."""
    w1, b1, w2, b2, w3, b3 = params
    return (
        w1[:obs_dim].astype(jnp.bfloat16),              # w1x
        w1[obs_dim:].astype(jnp.bfloat16),               # w1a
        b1.reshape(1, HIDDEN).astype(jnp.float32),       # b1
        w2.astype(jnp.bfloat16),                         # w2
        b2.reshape(1, HIDDEN).astype(jnp.float32),       # b2
        w3.reshape(1, HIDDEN).astype(jnp.float32),       # w3 transposed (VPU path)
        b3.reshape(1, 1).astype(jnp.float32),            # b3 scalar (SMEM)
    )


@jax.jit
def sac_critic_forward(x, a, kparams):
    """Pallas implementation of SACCritic.forward(x, a) -> (B, 1) float32."""
    w1x, w1a, b1, w2, b2, w3t, b3 = kparams
    B, obs_dim = x.shape
    act_dim = a.shape[-1]

    # Batch tile: multiple of 128 (packed-output layout), capped at 1024.
    # ceil(B/2) keeps >= 2 parallel grid steps once B > 128 (v7x megacore);
    # large B gets 1024-row tiles to amortize the ~0.35 us per-step overhead.
    tile_b = min(1024, _round_up(max(1, -(-B // 2)), 128))
    b_pad = _round_up(B, tile_b)
    if b_pad != B:  # pad only when needed (no-op for power-of-2 batches >=128)
        x = jnp.pad(x, ((0, b_pad - B), (0, 0)))
        a = jnp.pad(a, ((0, b_pad - B), (0, 0)))

    num_tiles = b_pad // tile_b
    rows = tile_b // LANES

    def resident(shape):  # same block every step -> stays VMEM-resident
        return pl.BlockSpec(shape, lambda i: (0, 0))

    out = pl.pallas_call(
        _critic_kernel,
        out_shape=jax.ShapeDtypeStruct((num_tiles, rows, LANES), jnp.float32),
        grid=(num_tiles,),
        in_specs=[
            pl.BlockSpec((tile_b, obs_dim), lambda i: (i, 0)),   # x tile (f32)
            pl.BlockSpec((tile_b, act_dim), lambda i: (i, 0)),   # a tile (f32)
            resident((obs_dim, HIDDEN)),                         # w1x (bf16)
            resident((act_dim, HIDDEN)),                         # w1a (bf16)
            resident((1, HIDDEN)),                               # b1  (f32)
            resident((HIDDEN, HIDDEN)),                          # w2  (bf16)
            resident((1, HIDDEN)),                               # b2  (f32)
            resident((1, HIDDEN)),                               # w3ᵀ (f32)
            pl.BlockSpec(memory_space=pltpu.MemorySpace.SMEM),   # b3 scalar
        ],
        out_specs=pl.BlockSpec((1, rows, LANES), lambda i: (i, 0, 0)),
        compiler_params=pltpu.CompilerParams(
            dimension_semantics=("parallel",),
            vmem_limit_bytes=32 << 20,
        ),
    )(x, a, w1x, w1a, b1, w2, b2, w3t, b3)

    # Unpack the lane-dense slab back to the module's (B, 1) output.
    return out.reshape(-1)[:B].reshape(B, 1)


def init_params(key, obs_dim, act_dim):
    """Deterministic init mimicking torch.nn.Linear default U(-1/sqrt(fan_in), ...)."""
    dims = [(obs_dim + act_dim, HIDDEN), (HIDDEN, HIDDEN), (HIDDEN, 1)]
    params = []
    for fan_in, fan_out in dims:
        key, kw, kb = jax.random.split(key, 3)
        bound = 1.0 / math.sqrt(fan_in)
        w = jax.random.uniform(kw, (fan_in, fan_out), jnp.float32,
                               minval=-bound, maxval=bound)
        b = jax.random.uniform(kb, (1, fan_out), jnp.float32,
                               minval=-bound, maxval=bound)
        params.extend([w, b])
    return tuple(params)


def reference_forward_f32(x, a, params):
    """Pure-f32 reference (original PyTorch module semantics)."""
    w1, b1, w2, b2, w3, b3 = params
    xa = jnp.concatenate([x, a], axis=-1)
    h1 = jnp.maximum(xa @ w1 + b1, 0.0)
    h2 = jnp.maximum(h1 @ w2 + b2, 0.0)
    return h2 @ w3 + b3


def reference_forward_bf16(x, a, params):
    """Pure-JAX reference matching the kernel's bf16-in / f32-accumulate numerics."""
    w1, b1, w2, b2, w3, b3 = params
    xa = jnp.concatenate([x.astype(jnp.bfloat16), a.astype(jnp.bfloat16)], -1)
    h1 = jnp.dot(xa, w1.astype(jnp.bfloat16),
                 preferred_element_type=jnp.float32) + b1
    h1 = jnp.maximum(h1, 0.0)
    h2 = jnp.dot(h1.astype(jnp.bfloat16), w2.astype(jnp.bfloat16),
                 preferred_element_type=jnp.float32) + b2
    h2 = jnp.maximum(h2, 0.0)
    return jnp.dot(h2, w3, preferred_element_type=jnp.float32) + b3


if __name__ == "__main__":
    B, OBS_DIM, ACT_DIM = 8, 16, 8
    key = jax.random.PRNGKey(0)
    kx, ka, kp = jax.random.split(key, 3)

    x = jax.random.normal(kx, (B, OBS_DIM), jnp.float32)
    a = jax.random.normal(ka, (B, ACT_DIM), jnp.float32)
    params = init_params(kp, OBS_DIM, ACT_DIM)
    kparams = prepare_params(params, OBS_DIM)   # one-time split/cast, cached

    out = jax.block_until_ready(sac_critic_forward(x, a, kparams))
    assert out.shape == (B, 1), out.shape

    # Tight check against a reference with the same bf16-in/f32-acc numerics.
    ref_bf16 = reference_forward_bf16(x, a, params)
    assert jnp.allclose(out, ref_bf16, atol=2e-3, rtol=2e-3), \
        "mismatch vs bf16-numerics reference"

    # Looser check against the original f32 module semantics.
    ref_f32 = reference_forward_f32(x, a, params)
    assert jnp.allclose(out, ref_f32, atol=5e-2, rtol=5e-2), \
        "mismatch vs f32 reference"

    print("KERNEL_OK")
</pallas_src>

<mosaic_0001>
module attributes {stable_mosaic.version = 11 : i64} {
  func.func @_critic_kernel(%arg0: i32, %arg1: memref<128x16xf32, #tpu.memory_space<vmem>>, %arg2: memref<128x8xf32, #tpu.memory_space<vmem>>, %arg3: memref<16x256xbf16, #tpu.memory_space<vmem>>, %arg4: memref<8x256xbf16, #tpu.memory_space<vmem>>, %arg5: memref<1x256xf32, #tpu.memory_space<vmem>>, %arg6: memref<256x256xbf16, #tpu.memory_space<vmem>>, %arg7: memref<1x256xf32, #tpu.memory_space<vmem>>, %arg8: memref<1x256xf32, #tpu.memory_space<vmem>>, %arg9: memref<1x1xf32, #tpu.memory_space<smem>>, %arg10: memref<1x1x128xf32, #tpu.memory_space<vmem>>) attributes {dimension_semantics = [#tpu.dimension_semantics<parallel>], iteration_bounds = array<i64: 1>, scalar_prefetch = 0 : i64, scratch_operands = 0 : i64, tpu.core_type = #tpu.core_type<tc>, window_params = [{transform_indices = @transform_0, window_bounds = array<i64: 128, 16>}, {transform_indices = @transform_1, window_bounds = array<i64: 128, 8>}, {pipeline_mode = #tpu.pipeline_mode<synchronous>, transform_indices = @transform_2, window_bounds = array<i64: 16, 256>}, {pipeline_mode = #tpu.pipeline_mode<synchronous>, transform_indices = @transform_3, window_bounds = array<i64: 8, 256>}, {pipeline_mode = #tpu.pipeline_mode<synchronous>, transform_indices = @transform_4, window_bounds = array<i64: 1, 256>}, {pipeline_mode = #tpu.pipeline_mode<synchronous>, transform_indices = @transform_5, window_bounds = array<i64: 256, 256>}, {pipeline_mode = #tpu.pipeline_mode<synchronous>, transform_indices = @transform_6, window_bounds = array<i64: 1, 256>}, {pipeline_mode = #tpu.pipeline_mode<synchronous>, transform_indices = @transform_7, window_bounds = array<i64: 1, 256>}, {transform_indices = @transform_8, window_bounds = array<i64: 1, 1>}, {transform_indices = @transform_9, window_bounds = array<i64: 1, 1, 128>}]} {
    %c0 = arith.constant 0 : index
    %c0_0 = arith.constant 0 : index
    %0 = vector.load %arg1[%c0, %c0_0] : memref<128x16xf32, #tpu.memory_space<vmem>>, vector<128x16xf32>
    %1 = arith.truncf %0 : vector<128x16xf32> to vector<128x16xbf16>
    %c0_1 = arith.constant 0 : index
    %c0_2 = arith.constant 0 : index
    %2 = vector.load %arg3[%c0_1, %c0_2] : memref<16x256xbf16, #tpu.memory_space<vmem>>, vector<16x256xbf16>
    %cst = arith.constant dense<0.000000e+00> : vector<128x256xf32>
    %3 = tpu.matmul %1, %2, %cst {dimension_numbers = #tpu.dot_dimension_numbers<[1], [0], [0], [1], [0, 0, 1, 1], [], []>} : vector<128x16xbf16>, vector<16x256xbf16>, vector<128x256xf32> -> vector<128x256xf32>
    %c0_3 = arith.constant 0 : index
    %c0_4 = arith.constant 0 : index
    %4 = vector.load %arg2[%c0_3, %c0_4] : memref<128x8xf32, #tpu.memory_space<vmem>>, vector<128x8xf32>
    %5 = arith.truncf %4 : vector<128x8xf32> to vector<128x8xbf16>
    %c0_5 = arith.constant 0 : index
    %c0_6 = arith.constant 0 : index
    %6 = vector.load %arg4[%c0_5, %c0_6] : memref<8x256xbf16, #tpu.memory_space<vmem>>, vector<8x256xbf16>
    %cst_7 = arith.constant dense<0.000000e+00> : vector<128x256xf32>
    %7 = tpu.matmul %5, %6, %cst_7 {dimension_numbers = #tpu.dot_dimension_numbers<[1], [0], [0], [1], [0, 0, 1, 1], [], []>} : vector<128x8xbf16>, vector<8x256xbf16>, vector<128x256xf32> -> vector<128x256xf32>
    %8 = arith.addf %3, %7 : vector<128x256xf32>
    %c0_8 = arith.constant 0 : index
    %c0_9 = arith.constant 0 : index
    %9 = vector.load %arg5[%c0_8, %c0_9] : memref<1x256xf32, #tpu.memory_space<vmem>>, vector<1x256xf32>
    %10 = vector.broadcast %9 : vector<1x256xf32> to vector<128x256xf32>
    %11 = arith.addf %8, %10 : vector<128x256xf32>
    %cst_10 = arith.constant 0.000000e+00 : f32
    %12 = vector.broadcast %cst_10 : f32 to vector<128x256xf32>
    %13 = arith.maximumf %11, %12 : vector<128x256xf32>
    %14 = arith.truncf %13 : vector<128x256xf32> to vector<128x256xbf16>
    %c0_11 = arith.constant 0 : index
    %c0_12 = arith.constant 0 : index
    %15 = vector.load %arg6[%c0_11, %c0_12] : memref<256x256xbf16, #tpu.memory_space<vmem>>, vector<256x256xbf16>
    %cst_13 = arith.constant dense<0.000000e+00> : vector<128x256xf32>
    %16 = tpu.matmul %14, %15, %cst_13 {dimension_numbers = #tpu.dot_dimension_numbers<[1], [0], [0], [1], [0, 0, 1, 1], [], []>} : vector<128x256xbf16>, vector<256x256xbf16>, vector<128x256xf32> -> vector<128x256xf32>
    %c0_14 = arith.constant 0 : index
    %c0_15 = arith.constant 0 : index
    %17 = vector.load %arg7[%c0_14, %c0_15] : memref<1x256xf32, #tpu.memory_space<vmem>>, vector<1x256xf32>
    %18 = vector.broadcast %17 : vector<1x256xf32> to vector<128x256xf32>
    %19 = arith.addf %16, %18 : vector<128x256xf32>
    %cst_16 = arith.constant 0.000000e+00 : f32
    %20 = vector.broadcast %cst_16 : f32 to vector<128x256xf32>
    %21 = arith.maximumf %19, %20 : vector<128x256xf32>
    %22 = vector.shape_cast %21 : vector<128x256xf32> to vector<1x128x256xf32>
    %c0_17 = arith.constant 0 : index
    %c0_18 = arith.constant 0 : index
    %23 = vector.load %arg8[%c0_17, %c0_18] : memref<1x256xf32, #tpu.memory_space<vmem>>, vector<1x256xf32>
    %24 = vector.shape_cast %23 : vector<1x256xf32> to vector<1x1x256xf32>
    %25 = vector.broadcast %24 : vector<1x1x256xf32> to vector<1x128x256xf32>
    %26 = arith.mulf %22, %25 : vector<1x128x256xf32>
    %cst_19 = arith.constant dense<0.000000e+00> : vector<1x128xf32>
    %27 = vector.multi_reduction <add>, %26, %cst_19 [2] : vector<1x128x256xf32> to vector<1x128xf32>
    %c0_20 = arith.constant 0 : index
    %c0_21 = arith.constant 0 : index
    %28 = memref.load %arg9[%c0_20, %c0_21] : memref<1x1xf32, #tpu.memory_space<smem>>
    %29 = vector.broadcast %28 : f32 to vector<1x128xf32>
    %30 = arith.addf %27, %29 : vector<1x128xf32>
    %c0_22 = arith.constant 0 : index
    %c0_23 = arith.constant 0 : index
    %c0_24 = arith.constant 0 : index
    %31 = vector.load %arg10[%c0_22, %c0_23, %c0_24] : memref<1x1x128xf32, #tpu.memory_space<vmem>>, vector<1x1x128xf32>
    %32 = vector.shape_cast %31 : vector<1x1x128xf32> to vector<1x128xf32>
    %33 = vector.shape_cast %30 : vector<1x128xf32> to vector<1x1x128xf32>
    tpu.vector_store %arg10[%c0_22, %c0_23, %c0_24], %33 {strides = array<i32>} : memref<1x1x128xf32, #tpu.memory_space<vmem>>, vector<1x1x128xf32>,
    return
  }
  func.func @transform_0(%arg0: i32) -> (i32, i32) {
    %c0_i32 = arith.constant 0 : i32
    %c0_i32_0 = arith.constant 0 : i32
    return %arg0, %c0_i32 : i32, i32
  }
  func.func @transform_1(%arg0: i32) -> (i32, i32) {
    %c0_i32 = arith.constant 0 : i32
    %c0_i32_0 = arith.constant 0 : i32
    return %arg0, %c0_i32 : i32, i32
  }
  func.func @transform_2(%arg0: i32) -> (i32, i32) {
    %c0_i32 = arith.constant 0 : i32
    %c0_i32_0 = arith.constant 0 : i32
    %c0_i32_1 = arith.constant 0 : i32
    return %c0_i32, %c0_i32_0 : i32, i32
  }
  func.func @transform_3(%arg0: i32) -> (i32, i32) {
    %c0_i32 = arith.constant 0 : i32
    %c0_i32_0 = arith.constant 0 : i32
    %c0_i32_1 = arith.constant 0 : i32
    return %c0_i32, %c0_i32_0 : i32, i32
  }
  func.func @transform_4(%arg0: i32) -> (i32, i32) {
    %c0_i32 = arith.constant 0 : i32
    %c0_i32_0 = arith.constant 0 : i32
    %c0_i32_1 = arith.constant 0 : i32
    return %c0_i32, %c0_i32_0 : i32, i32
  }
  func.func @transform_5(%arg0: i32) -> (i32, i32) {
    %c0_i32 = arith.constant 0 : i32
    %c0_i32_0 = arith.constant 0 : i32
    %c0_i32_1 = arith.constant 0 : i32
    return %c0_i32, %c0_i32_0 : i32, i32
  }
  func.func @transform_6(%arg0: i32) -> (i32, i32) {
    %c0_i32 = arith.constant 0 : i32
    %c0_i32_0 = arith.constant 0 : i32
    %c0_i32_1 = arith.constant 0 : i32
    return %c0_i32, %c0_i32_0 : i32, i32
  }
  func.func @transform_7(%arg0: i32) -> (i32, i32) {
    %c0_i32 = arith.constant 0 : i32
    %c0_i32_0 = arith.constant 0 : i32
    %c0_i32_1 = arith.constant 0 : i32
    return %c0_i32, %c0_i32_0 : i32, i32
  }
  func.func @transform_8(%arg0: i32) -> (i32, i32) {
    %c0_i32 = arith.constant 0 : i32
    %c0_i32_0 = arith.constant 0 : i32
    %c0_i32_1 = arith.constant 0 : i32
    return %c0_i32, %c0_i32_0 : i32, i32
  }
  func.func @transform_9(%arg0: i32) -> (i32, i32, i32) {
    %c0_i32 = arith.constant 0 : i32
    %c0_i32_0 = arith.constant 0 : i32
    %c0_i32_1 = arith.constant 0 : i32
    return %arg0, %c0_i32, %c0_i32_0 : i32, i32, i32
  }
}

</mosaic_0001>

<llo_original>
// kernel: sac_critic_forward.1
$region0: #{sac_critic_forward.1}
  #allocation0 [shape = 'u32[]', space=smem, size = 0x4, offset = 0x4, fixed_abs, tag = 'smem constant byte address 0x4 - core index']
  #allocation1 [shape = 'u32[144,128]{1,0:T(1,128)}', space=vmem, size = 0x12000, scoped, tag = 'internal scratch']
  #allocation2 [shape = 'f32[1,1]{1,0:T(1,128)S(6)}', space=smem, size = 0x200, scoped, tag = 'scoped memory for sac_critic_forward.1']
  %s0 = inlined_call_operand.vmem [shape: f32[128,16], index: 0, kind: input, shape index: {}]
  %s1 = inlined_call_operand.vmem [shape: f32[128,8], index: 1, kind: input, shape index: {}]
  %s2 = inlined_call_operand.vmem [shape: bf16[16,256], index: 2, kind: input, shape index: {}]
  %s3 = inlined_call_operand.vmem [shape: bf16[8,256], index: 3, kind: input, shape index: {}]
  %s4 = inlined_call_operand.vmem [shape: f32[1,256], index: 4, kind: input, shape index: {}]
  %s5 = inlined_call_operand.vmem [shape: bf16[256,256], index: 5, kind: input, shape index: {}]
  %s6 = inlined_call_operand.vmem [shape: f32[1,256], index: 6, kind: input, shape index: {}]
  %s7 = inlined_call_operand.vmem [shape: f32[1,256], index: 7, kind: input, shape index: {}]
  %s8 = inlined_call_operand.<no memory space> [shape: f32[1,1], index: 8, kind: input, shape index: {}]
  %s9 = inlined_call_operand.vmem [shape: f32[1,1,128], index: 9, kind: output, shape index: {}]
  %s10 = sld [smem:[#allocation0]]
  $region46: #{sac_critic_forward.1} parent=0
    _
  %s12 = ssub.s32 1, %s10
  %s13 = scalar_select 0, %s12, %s10
  %14 = sst [smem:[#allocation2]] %s8
  // Predicated region
  $region2: #{sac_critic_forward.1} parent=0 // pred_check
    _
  $region3: #{sac_critic_forward.1} parent=0 // pred_check_branch
    %16 = sbr.rel (0) target = $region5
  $region4: #{sac_critic_forward.1} parent=0 // pred_region
    _
  $region5: #{sac_critic_forward.1} parent=0 // pred_fallthru
    _
  // Predicated region
  $region6: #{sac_critic_forward.1} parent=0 // pred_check
    _
  $region7: #{sac_critic_forward.1} parent=0 // pred_check_branch
    %18 = sbr.rel (0) target = $region9
  $region8: #{sac_critic_forward.1} parent=0 // pred_region
    _
  $region9: #{sac_critic_forward.1} parent=0 // pred_fallthru
    _
  // Predicated region
  $region10: #{sac_critic_forward.1} parent=0 // pred_check
    _
  $region11: #{sac_critic_forward.1} parent=0 // pred_check_branch
    %20 = sbr.rel (0) target = $region13
  $region12: #{sac_critic_forward.1} parent=0 // pred_region
    _
  $region13: #{sac_critic_forward.1} parent=0 // pred_fallthru
    _
  // Predicated region
  $region14: #{sac_critic_forward.1} parent=0 // pred_check
    _
  $region15: #{sac_critic_forward.1} parent=0 // pred_check_branch
    %22 = sbr.rel (0) target = $region17
  $region16: #{sac_critic_forward.1} parent=0 // pred_region
    _
  $region17: #{sac_critic_forward.1} parent=0 // pred_fallthru
    _
  // Predicated region
  $region18: #{sac_critic_forward.1} parent=0 // pred_check
    _
  $region19: #{sac_critic_forward.1} parent=0 // pred_check_branch
    %24 = sbr.rel (0) target = $region21
  $region20: #{sac_critic_forward.1} parent=0 // pred_region
    _
  $region21: #{sac_critic_forward.1} parent=0 // pred_fallthru
    _
  // Predicated region
  $region22: #{sac_critic_forward.1} parent=0 // pred_check
    _
  $region23: #{sac_critic_forward.1} parent=0 // pred_check_branch
    %26 = sbr.rel (0) target = $region25
  $region24: #{sac_critic_forward.1} parent=0 // pred_region
    _
  $region25: #{sac_critic_forward.1} parent=0 // pred_fallthru
    _
  // Predicated region
  $region26: #{sac_critic_forward.1} parent=0 // pred_check
    _
  $region27: #{sac_critic_forward.1} parent=0 // pred_check_branch
    %28 = sbr.rel (0) target = $region29
  $region28: #{sac_critic_forward.1} parent=0 // pred_region
    _
  $region29: #{sac_critic_forward.1} parent=0 // pred_fallthru
    _
  // Predicated region
  $region30: #{sac_critic_forward.1} parent=0 // pred_check
    _
  $region31: #{sac_critic_forward.1} parent=0 // pred_check_branch
    %30 = sbr.rel (0) target = $region33
  $region32: #{sac_critic_forward.1} parent=0 // pred_region
    _
  $region33: #{sac_critic_forward.1} parent=0 // pred_fallthru
    _
  // Predicated region
  $region34: #{sac_critic_forward.1} parent=0 // pred_check
    _
  $region35: #{sac_critic_forward.1} parent=0 // pred_check_branch
    %32 = sbr.rel (0) target = $region37
  $region36: #{sac_critic_forward.1} parent=0 // pred_region
    _
  $region37: #{sac_critic_forward.1} parent=0 // pred_fallthru
    _
  %v34 = vld [vmem:[%s0] sm:$0xff]
  %v35 = vld [vmem:[%s0 + $0x8] sm:$0xff]
  %v36 = vld [vmem:[%s0 + $0x10] sm:$0xff]
  %v37 = vld [vmem:[%s0 + $0x18] sm:$0xff]
  %v38 = vld [vmem:[%s0 + $0x20] sm:$0xff]
  %v39 = vld [vmem:[%s0 + $0x28] sm:$0xff]
  %v40 = vld [vmem:[%s0 + $0x30] sm:$0xff]
  %v41 = vld [vmem:[%s0 + $0x38] sm:$0xff]
  %v42 = vld [vmem:[%s0 + $0x40] sm:$0xff]
  %v43 = vld [vmem:[%s0 + $0x48] sm:$0xff]
  %v44 = vld [vmem:[%s0 + $0x50] sm:$0xff]
  %v45 = vld [vmem:[%s0 + $0x58] sm:$0xff]
  %v46 = vld [vmem:[%s0 + $0x60] sm:$0xff]
  %v47 = vld [vmem:[%s0 + $0x68] sm:$0xff]
  %v48 = vld [vmem:[%s0 + $0x70] sm:$0xff]
  %v49 = vld [vmem:[%s0 + $0x78] sm:$0xff]
  %v50 = vpack.c.bf16 %v35, %v34
  %v51 = vpack.c.bf16 %v37, %v36
  %v52 = vpack.c.bf16 %v39, %v38
  %v53 = vpack.c.bf16 %v41, %v40
  %v54 = vpack.c.bf16 %v43, %v42
  %v55 = vpack.c.bf16 %v45, %v44
  %v56 = vpack.c.bf16 %v47, %v46
  %v57 = vpack.c.bf16 %v49, %v48
  %v58 = vld [vmem:[%s2] sm:$0xff]
  %v59 = vld [vmem:[%s2 + $0x8] sm:$0xff]
  %v60 = vld [vmem:[%s1] sm:$0xff]
  %v61 = vld [vmem:[%s1 + $0x8] sm:$0xff]
  %v62 = vld [vmem:[%s1 + $0x10] sm:$0xff]
  %v63 = vld [vmem:[%s1 + $0x18] sm:$0xff]
  %v64 = vld [vmem:[%s1 + $0x20] sm:$0xff]
  %v65 = vld [vmem:[%s1 + $0x28] sm:$0xff]
  %v66 = vld [vmem:[%s1 + $0x30] sm:$0xff]
  %v67 = vld [vmem:[%s1 + $0x38] sm:$0xff]
  %v68 = vld [vmem:[%s1 + $0x40] sm:$0xff]
  %v69 = vld [vmem:[%s1 + $0x48] sm:$0xff]
  %v70 = vld [vmem:[%s1 + $0x50] sm:$0xff]
  %v71 = vld [vmem:[%s1 + $0x58] sm:$0xff]
  %v72 = vld [vmem:[%s1 + $0x60] sm:$0xff]
  %v73 = vld [vmem:[%s1 + $0x68] sm:$0xff]
  %v74 = vld [vmem:[%s1 + $0x70] sm:$0xff]
  %v75 = vld [vmem:[%s1 + $0x78] sm:$0xff]
  %v76 = vpack.c.bf16 %v61, %v60
  %v77 = vpack.c.bf16 %v63, %v62
  %v78 = vpack.c.bf16 %v65, %v64
  %v79 = vpack.c.bf16 %v67, %v66
  %v80 = vpack.c.bf16 %v69, %v68
  %v81 = vpack.c.bf16 %v71, %v70
  %v82 = vpack.c.bf16 %v73, %v72
  %v83 = vpack.c.bf16 %v75, %v74
  %v84 = vld [vmem:[%s3] sm:$0xff]
  %v86 = vunpack.c.l.b16 %v84
  %v87 = vunpack.c.h.b16 %v84
  %v88 = vpack.c.b16 %v86, %v86
  %v89 = vpack.c.b16 %v87, %v87
  %vm90 = vcmask 64512
  %v92 = vsel %vm90, %v76, 0
  %v95 = vsel %vm90, %v77, 0
  %v98 = vsel %vm90, %v78, 0
  %v101 = vsel %vm90, %v79, 0
  %v104 = vsel %vm90, %v80, 0
  %v107 = vsel %vm90, %v81, 0
  %v110 = vsel %vm90, %v82, 0
  %v113 = vsel %vm90, %v83, 0
  %vm115 = vcmask 1043456
  %v117 = vsel %vm115, %v88, 0
  %v120 = vsel %vm115, %v89, 0
  %122 = vmatprep.subr.bf16.mxu0 0
  %123 = vmatpush1.bf16.msra.mxu0 0
  %124 = vmatprep.subr.bf16.mxu0 0
  %125 = vmatpush1.bf16.msra.mxu0 0
  %126 = vmatprep.subr.bf16.mxu0 0
  %127 = vmatpush1.bf16.msra.mxu0 0
  %128 = vmatprep.subr.bf16.mxu0 0
  %129 = vmatpush1.bf16.msra.mxu0 0
  %130 = vmatprep.subr.bf16.mxu0 0
  %131 = vmatpush1.bf16.msra.mxu0 0
  %132 = vmatprep.subr.bf16.mxu0 0
  %133 = vmatpush1.bf16.msra.mxu0 0
  %134 = vmatprep.subr.bf16.mxu0 0
  %135 = vmatpush1.bf16.msra.mxu0 0
  %136 = vmatprep.subr.bf16.mxu0 %v120
  %137 = vmatpush1.bf16.msra.mxu0 %v117
  %138 = vmatprep.subr.bf16.mxu0 0
  %139 = vmatpush2.bf16.msra.mxu0 0
  %140 = vmatprep.subr.bf16.mxu0 0
  %141 = vmatpush2.bf16.msra.mxu0 0
  %142 = vmatprep.subr.bf16.mxu0 0
  %143 = vmatpush2.bf16.msra.mxu0 0
  %144 = vmatprep.subr.bf16.mxu0 0
  %145 = vmatpush2.bf16.msra.mxu0 0
  %146 = vmatprep.subr.bf16.mxu0 0
  %147 = vmatpush2.bf16.msra.mxu0 0
  %148 = vmatprep.subr.bf16.mxu0 0
  %149 = vmatpush2.bf16.msra.mxu0 0
  %150 = vmatprep.subr.bf16.mxu0 0
  %151 = vmatpush2.bf16.msra.mxu0 0
  %152 = vmatprep.subr.bf16.mxu0 0
  %153 = vmatpush2.bf16.msra.mxu0 0
  %154 = vmatprep.mubr.bf16.mxu0 0
  %155 = vmatmul.mubr.bf16.gmra.mxu0 %v92
  %v156 = vpop.f32.mrf.mxu0
  %v157 = vadd.f32 0.0, %v156
  %v158 = vpop.f32.mrf.mxu0
  %v159 = vadd.f32 0.0, %v158
  %v160 = vpop.f32.mrf.mxu0
  %v161 = vadd.f32 0.0, %v160
  %v162 = vpop.f32.mrf.mxu0
  %v163 = vadd.f32 0.0, %v162
  %164 = vmatprep.mubr.bf16.mxu0 0
  %165 = vmatmul.mubr.bf16.gmra.mxu0 %v95
  %v166 = vpop.f32.mrf.mxu0
  %v167 = vadd.f32 0.0, %v166
  %v168 = vpop.f32.mrf.mxu0
  %v169 = vadd.f32 0.0, %v168
  %v170 = vpop.f32.mrf.mxu0
  %v171 = vadd.f32 0.0, %v170
  %v172 = vpop.f32.mrf.mxu0
  %v173 = vadd.f32 0.0, %v172
  %174 = vmatprep.mubr.bf16.mxu0 0
  %175 = vmatmul.mubr.bf16.gmra.mxu0 %v98
  %v176 = vpop.f32.mrf.mxu0
  %v177 = vadd.f32 0.0, %v176
  %v178 = vpop.f32.mrf.mxu0
  %v179 = vadd.f32 0.0, %v178
  %v180 = vpop.f32.mrf.mxu0
  %v181 = vadd.f32 0.0, %v180
  %v182 = vpop.f32.mrf.mxu0
  %v183 = vadd.f32 0.0, %v182
  %184 = vmatprep.mubr.bf16.mxu0 0
  %185 = vmatmul.mubr.bf16.gmra.mxu0 %v101
  %v186 = vpop.f32.mrf.mxu0
  %v187 = vadd.f32 0.0, %v186
  %v188 = vpop.f32.mrf.mxu0
  %v189 = vadd.f32 0.0, %v188
  %v190 = vpop.f32.mrf.mxu0
  %v191 = vadd.f32 0.0, %v190
  %v192 = vpop.f32.mrf.mxu0
  %v193 = vadd.f32 0.0, %v192
  %194 = vmatprep.mubr.bf16.mxu0 0
  %195 = vmatmul.mubr.bf16.gmra.mxu0 %v104
  %v196 = vpop.f32.mrf.mxu0
  %v197 = vadd.f32 0.0, %v196
  %v198 = vpop.f32.mrf.mxu0
  %v199 = vadd.f32 0.0, %v198
  %v200 = vpop.f32.mrf.mxu0
  %v201 = vadd.f32 0.0, %v200
  %v202 = vpop.f32.mrf.mxu0
  %v203 = vadd.f32 0.0, %v202
  %204 = vmatprep.mubr.bf16.mxu0 0
  %205 = vmatmul.mubr.bf16.gmra.mxu0 %v107
  %v206 = vpop.f32.mrf.mxu0
  %v207 = vadd.f32 0.0, %v206
  %v208 = vpop.f32.mrf.mxu0
  %v209 = vadd.f32 0.0, %v208
  %v210 = vpop.f32.mrf.mxu0
  %v211 = vadd.f32 0.0, %v210
  %v212 = vpop.f32.mrf.mxu0
  %v213 = vadd.f32 0.0, %v212
  %214 = vmatprep.mubr.bf16.mxu0 0
  %215 = vmatmul.mubr.bf16.gmra.mxu0 %v110
  %v216 = vpop.f32.mrf.mxu0
  %v217 = vadd.f32 0.0, %v216
  %v218 = vpop.f32.mrf.mxu0
  %v219 = vadd.f32 0.0, %v218
  %v220 = vpop.f32.mrf.mxu0
  %v221 = vadd.f32 0.0, %v220
  %v222 = vpop.f32.mrf.mxu0
  %v223 = vadd.f32 0.0, %v222
  %224 = vmatprep.mubr.bf16.mxu0 0
  %225 = vmatmul.mubr.bf16.gmra.mxu0 %v113
  %v226 = vpop.f32.mrf.mxu0
  %v227 = vadd.f32 0.0, %v226
  %v228 = vpop.f32.mrf.mxu0
  %v229 = vadd.f32 0.0, %v228
  %v230 = vpop.f32.mrf.mxu0
  %v231 = vadd.f32 0.0, %v230
  %v232 = vpop.f32.mrf.mxu0
  %v233 = vadd.f32 0.0, %v232
  %234 = vdwg.mxu0
  %v237 = vunpack.c.l.b16 %v58
  %v238 = vunpack.c.h.b16 %v58
  %v239 = vunpack.c.l.b16 %v59
  %v240 = vunpack.c.h.b16 %v59
  %v241 = vpack.c.b16 %v239, %v237
  %v242 = vpack.c.b16 %v240, %v238
  %vm245 = vcmask 130048
  %v247 = vsel %vm245, %v50, 0
  %v250 = vsel %vm245, %v51, 0
  %v253 = vsel %vm245, %v52, 0
  %v256 = vsel %vm245, %v53, 0
  %v259 = vsel %vm245, %v54, 0
  %v262 = vsel %vm245, %v55, 0
  %v265 = vsel %vm245, %v56, 0
  %v268 = vsel %vm245, %v57, 0
  %270 = vmatprep.subr.bf16.mxu0 0
  %271 = vmatpush1.bf16.msra.mxu0 0
  %272 = vmatprep.subr.bf16.mxu0 0
  %273 = vmatpush1.bf16.msra.mxu0 0
  %274 = vmatprep.subr.bf16.mxu0 0
  %275 = vmatpush1.bf16.msra.mxu0 0
  %276 = vmatprep.subr.bf16.mxu0 0
  %277 = vmatpush1.bf16.msra.mxu0 0
  %278 = vmatprep.subr.bf16.mxu0 0
  %279 = vmatpush1.bf16.msra.mxu0 0
  %280 = vmatprep.subr.bf16.mxu0 0
  %281 = vmatpush1.bf16.msra.mxu0 0
  %282 = vmatprep.subr.bf16.mxu0 0
  %283 = vmatpush1.bf16.msra.mxu0 0
  %284 = vmatprep.subr.bf16.mxu0 %v242
  %285 = vmatpush1.bf16.msra.mxu0 %v241
  %286 = vmatprep.subr.bf16.mxu0 0
  %287 = vmatpush2.bf16.msra.mxu0 0
  %288 = vmatprep.subr.bf16.mxu0 0
  %289 = vmatpush2.bf16.msra.mxu0 0
  %290 = vmatprep.subr.bf16.mxu0 0
  %291 = vmatpush2.bf16.msra.mxu0 0
  %292 = vmatprep.subr.bf16.mxu0 0
  %293 = vmatpush2.bf16.msra.mxu0 0
  %294 = vmatprep.subr.bf16.mxu0 0
  %295 = vmatpush2.bf16.msra.mxu0 0
  %296 = vmatprep.subr.bf16.mxu0 0
  %297 = vmatpush2.bf16.msra.mxu0 0
  %298 = vmatprep.subr.bf16.mxu0 0
  %299 = vmatpush2.bf16.msra.mxu0 0
  %300 = vmatprep.subr.bf16.mxu0 0
  %301 = vmatpush2.bf16.msra.mxu0 0
  %302 = vmatprep.mubr.bf16.mxu0 0
  %303 = vmatmul.mubr.bf16.gmra.mxu0 %v247
  %v304 = vpop.f32.mrf.mxu0
  %v305 = vadd.f32 %v157, %v304
  %v306 = vpop.f32.mrf.mxu0
  %v307 = vadd.f32 %v159, %v306
  %v308 = vpop.f32.mrf.mxu0
  %v309 = vadd.f32 %v161, %v308
  %v310 = vpop.f32.mrf.mxu0
  %v311 = vadd.f32 %v163, %v310
  %312 = vmatprep.mubr.bf16.mxu0 0
  %313 = vmatmul.mubr.bf16.gmra.mxu0 %v250
  %v314 = vpop.f32.mrf.mxu0
  %v315 = vadd.f32 %v167, %v314
  %v316 = vpop.f32.mrf.mxu0
  %v317 = vadd.f32 %v169, %v316
  %v318 = vpop.f32.mrf.mxu0
  %v319 = vadd.f32 %v171, %v318
  %v320 = vpop.f32.mrf.mxu0
  %v321 = vadd.f32 %v173, %v320
  %322 = vmatprep.mubr.bf16.mxu0 0
  %323 = vmatmul.mubr.bf16.gmra.mxu0 %v253
  %v324 = vpop.f32.mrf.mxu0
  %v325 = vadd.f32 %v177, %v324
  %v326 = vpop.f32.mrf.mxu0
  %v327 = vadd.f32 %v179, %v326
  %v328 = vpop.f32.mrf.mxu0
  %v329 = vadd.f32 %v181, %v328
  %v330 = vpop.f32.mrf.mxu0
  %v331 = vadd.f32 %v183, %v330
  %332 = vmatprep.mubr.bf16.mxu0 0
  %333 = vmatmul.mubr.bf16.gmra.mxu0 %v256
  %v334 = vpop.f32.mrf.mxu0
  %v335 = vadd.f32 %v187, %v334
  %v336 = vpop.f32.mrf.mxu0
  %v337 = vadd.f32 %v189, %v336
  %v338 = vpop.f32.mrf.mxu0
  %v339 = vadd.f32 %v191, %v338
  %v340 = vpop.f32.mrf.mxu0
  %v341 = vadd.f32 %v193, %v340
  %342 = vmatprep.mubr.bf16.mxu0 0
  %343 = vmatmul.mubr.bf16.gmra.mxu0 %v259
  %v344 = vpop.f32.mrf.mxu0
  %v345 = vadd.f32 %v197, %v344
  %v346 = vpop.f32.mrf.mxu0
  %v347 = vadd.f32 %v199, %v346
  %v348 = vpop.f32.mrf.mxu0
  %v349 = vadd.f32 %v201, %v348
  %v350 = vpop.f32.mrf.mxu0
  %v351 = vadd.f32 %v203, %v350
  %352 = vmatprep.mubr.bf16.mxu0 0
  %353 = vmatmul.mubr.bf16.gmra.mxu0 %v262
  %v354 = vpop.f32.mrf.mxu0
  %v355 = vadd.f32 %v207, %v354
  %v356 = vpop.f32.mrf.mxu0
  %v357 = vadd.f32 %v209, %v356
  %v358 = vpop.f32.mrf.mxu0
  %v359 = vadd.f32 %v211, %v358
  %v360 = vpop.f32.mrf.mxu0
  %v361 = vadd.f32 %v213, %v360
  %362 = vmatprep.mubr.bf16.mxu0 0
  %363 = vmatmul.mubr.bf16.gmra.mxu0 %v265
  %v364 = vpop.f32.mrf.mxu0
  %v365 = vadd.f32 %v217, %v364
  %v366 = vpop.f32.mrf.mxu0
  %v367 = vadd.f32 %v219, %v366
  %v368 = vpop.f32.mrf.mxu0
  %v369 = vadd.f32 %v221, %v368
  %v370 = vpop.f32.mrf.mxu0
  %v371 = vadd.f32 %v223, %v370
  %372 = vmatprep.mubr.bf16.mxu0 0
  %373 = vmatmul.mubr.bf16.gmra.mxu0 %v268
  %v374 = vpop.f32.mrf.mxu0
  %v375 = vadd.f32 %v227, %v374
  %v376 = vpop.f32.mrf.mxu0
  %v377 = vadd.f32 %v229, %v376
  %v378 = vpop.f32.mrf.mxu0
  %v379 = vadd.f32 %v231, %v378
  %v380 = vpop.f32.mrf.mxu0
  %v381 = vadd.f32 %v233, %v380
  %382 = vdwg.mxu0
  %v383 = vld [vmem:[%s4] sm:$0x3]
  %v385 = vlaneseq
  %v386 = vshrl.u32 %v385, 7
  %v387 = vsub.s32 0, %v386
  %v388 = vrot.slane %v383, %v387
  %v389 = vlaneseq
  %v390 = vshrl.u32 %v389, 7
  %v391 = vsub.s32 1, %v390
  %v392 = vrot.slane %v383, %v391
  %v395 = vadd.f32 %v305, %v388
  %v396 = vadd.f32 %v307, %v392
  %v397 = vadd.f32 %v309, %v388
  %v398 = vadd.f32 %v311, %v392
  %v399 = vadd.f32 %v315, %v388
  %v400 = vadd.f32 %v317, %v392
  %v401 = vadd.f32 %v319, %v388
  %v402 = vadd.f32 %v321, %v392
  %v403 = vadd.f32 %v325, %v388
  %v404 = vadd.f32 %v327, %v392
  %v405 = vadd.f32 %v329, %v388
  %v406 = vadd.f32 %v331, %v392
  %v407 = vadd.f32 %v335, %v388
  %v408 = vadd.f32 %v337, %v392
  %v409 = vadd.f32 %v339, %v388
  %v410 = vadd.f32 %v341, %v392
  %v411 = vadd.f32 %v345, %v388
  %v412 = vadd.f32 %v347, %v392
  %v413 = vadd.f32 %v349, %v388
  %v414 = vadd.f32 %v351, %v392
  %v415 = vadd.f32 %v355, %v388
  %v416 = vadd.f32 %v357, %v392
  %v417 = vadd.f32 %v359, %v388
  %v418 = vadd.f32 %v361, %v392
  %v419 = vadd.f32 %v365, %v388
  %v420 = vadd.f32 %v367, %v392
  %v421 = vadd.f32 %v369, %v388
  %v422 = vadd.f32 %v371, %v392
  %v423 = vadd.f32 %v375, %v388
  %v424 = vadd.f32 %v377, %v392
  %v425 = vadd.f32 %v379, %v388
  %v426 = vadd.f32 %v381, %v392
  %v427 = vmax.f32 %v395, 0.0
  %v428 = vmax.f32 %v396, 0.0
  %v429 = vmax.f32 %v397, 0.0
  %v430 = vmax.f32 %v398, 0.0
  %v431 = vmax.f32 %v399, 0.0
  %v432 = vmax.f32 %v400, 0.0
  %v433 = vmax.f32 %v401, 0.0
  %v434 = vmax.f32 %v402, 0.0
  %v435 = vmax.f32 %v403, 0.0
  %v436 = vmax.f32 %v404, 0.0
  %v437 = vmax.f32 %v405, 0.0
  %v438 = vmax.f32 %v406, 0.0
  %v439 = vmax.f32 %v407, 0.0
  %v440 = vmax.f32 %v408, 0.0
  %v441 = vmax.f32 %v409, 0.0
  %v442 = vmax.f32 %v410, 0.0
  %v443 = vmax.f32 %v411, 0.0
  %v444 = vmax.f32 %v412, 0.0
  %v445 = vmax.f32 %v413, 0.0
  %v446 = vmax.f32 %v414, 0.0
  %v447 = vmax.f32 %v415, 0.0
  %v448 = vmax.f32 %v416, 0.0
  %v449 = vmax.f32 %v417, 0.0
  %v450 = vmax.f32 %v418, 0.0
  %v451 = vmax.f32 %v419, 0.0
  %v452 = vmax.f32 %v420, 0.0
  %v453 = vmax.f32 %v421, 0.0
  %v454 = vmax.f32 %v422, 0.0
  %v455 = vmax.f32 %v423, 0.0
  %v456 = vmax.f32 %v424, 0.0
  %v457 = vmax.f32 %v425, 0.0
  %v458 = vmax.f32 %v426, 0.0
  %v459 = vpack.c.bf16 %v429, %v427
  %v460 = vpack.c.bf16 %v430, %v428
  %v461 = vpack.c.bf16 %v433, %v431
  %v462 = vpack.c.bf16 %v434, %v432
  %v463 = vpack.c.bf16 %v437, %v435
  %v464 = vpack.c.bf16 %v438, %v436
  %v465 = vpack.c.bf16 %v441, %v439
  %v466 = vpack.c.bf16 %v442, %v440
  %v467 = vpack.c.bf16 %v445, %v443
  %v468 = vpack.c.bf16 %v446, %v444
  %v469 = vpack.c.bf16 %v449, %v447
  %v470 = vpack.c.bf16 %v450, %v448
  %v471 = vpack.c.bf16 %v453, %v451
  %v472 = vpack.c.bf16 %v454, %v452
  %v473 = vpack.c.bf16 %v457, %v455
  %v474 = vpack.c.bf16 %v458, %v456
  %v475 = vld [vmem:[%s5] sm:$0xff]
  %v476 = vld [vmem:[%s5 + $0x8] sm:$0xff]
  %v477 = vld [vmem:[%s5 + $0x10] sm:$0xff]
  %v478 = vld [vmem:[%s5 + $0x18] sm:$0xff]
  %v479 = vld [vmem:[%s5 + $0x20] sm:$0xff]
  %v480 = vld [vmem:[%s5 + $0x28] sm:$0xff]
  %v481 = vld [vmem:[%s5 + $0x30] sm:$0xff]
  %v482 = vld [vmem:[%s5 + $0x38] sm:$0xff]
  %v483 = vld [vmem:[%s5 + $0x40] sm:$0xff]
  %v484 = vld [vmem:[%s5 + $0x48] sm:$0xff]
  %v485 = vld [vmem:[%s5 + $0x50] sm:$0xff]
  %v486 = vld [vmem:[%s5 + $0x58] sm:$0xff]
  %v487 = vld [vmem:[%s5 + $0x60] sm:$0xff]
  %v488 = vld [vmem:[%s5 + $0x68] sm:$0xff]
  %v489 = vld [vmem:[%s5 + $0x70] sm:$0xff]
  %v490 = vld [vmem:[%s5 + $0x78] sm:$0xff]
  %v491 = vld [vmem:[%s5 + $0x80] sm:$0xff]
  %v492 = vld [vmem:[%s5 + $0x88] sm:$0xff]
  %v493 = vld [vmem:[%s5 + $0x90] sm:$0xff]
  %v494 = vld [vmem:[%s5 + $0x98] sm:$0xff]
  %v495 = vld [vmem:[%s5 + $0xa0] sm:$0xff]
  %v496 = vld [vmem:[%s5 + $0xa8] sm:$0xff]
  %v497 = vld [vmem:[%s5 + $0xb0] sm:$0xff]
  %v498 = vld [vmem:[%s5 + $0xb8] sm:$0xff]
  %v499 = vld [vmem:[%s5 + $0xc0] sm:$0xff]
  %v500 = vld [vmem:[%s5 + $0xc8] sm:$0xff]
  %v501 = vld [vmem:[%s5 + $0xd0] sm:$0xff]
  %v502 = vld [vmem:[%s5 + $0xd8] sm:$0xff]
  %v503 = vld [vmem:[%s5 + $0xe0] sm:$0xff]
  %v504 = vld [vmem:[%s5 + $0xe8] sm:$0xff]
  %v505 = vld [vmem:[%s5 + $0xf0] sm:$0xff]
  %v506 = vld [vmem:[%s5 + $0xf8] sm:$0xff]
  %v507 = vld [vmem:[%s6] sm:$0x3]
  %v509 = vlaneseq
  %v510 = vshrl.u32 %v509, 7
  %v511 = vsub.s32 0, %v510
  %v512 = vrot.slane %v507, %v511
  %v513 = vlaneseq
  %v514 = vshrl.u32 %v513, 7
  %v515 = vsub.s32 1, %v514
  %v516 = vrot.slane %v507, %v515
  %v551 = vunpack.c.l.b16 %v475
  %v552 = vunpack.c.h.b16 %v475
  %v553 = vunpack.c.l.b16 %v476
  %v554 = vunpack.c.h.b16 %v476
  %v555 = vunpack.c.l.b16 %v477
  %v556 = vunpack.c.h.b16 %v477
  %v557 = vunpack.c.l.b16 %v478
  %v558 = vunpack.c.h.b16 %v478
  %v559 = vunpack.c.l.b16 %v479
  %v560 = vunpack.c.h.b16 %v479
  %v561 = vunpack.c.l.b16 %v480
  %v562 = vunpack.c.h.b16 %v480
  %v563 = vunpack.c.l.b16 %v481
  %v564 = vunpack.c.h.b16 %v481
  %v565 = vunpack.c.l.b16 %v482
  %v566 = vunpack.c.h.b16 %v482
  %v567 = vunpack.c.l.b16 %v483
  %v568 = vunpack.c.h.b16 %v483
  %v569 = vunpack.c.l.b16 %v484
  %v570 = vunpack.c.h.b16 %v484
  %v571 = vunpack.c.l.b16 %v485
  %v572 = vunpack.c.h.b16 %v485
  %v573 = vunpack.c.l.b16 %v486
  %v574 = vunpack.c.h.b16 %v486
  %v575 = vunpack.c.l.b16 %v487
  %v576 = vunpack.c.h.b16 %v487
  %v577 = vunpack.c.l.b16 %v488
  %v578 = vunpack.c.h.b16 %v488
  %v579 = vunpack.c.l.b16 %v489
  %v580 = vunpack.c.h.b16 %v489
  %v581 = vunpack.c.l.b16 %v490
  %v582 = vunpack.c.h.b16 %v490
  %v583 = vunpack.c.l.b16 %v491
  %v584 = vunpack.c.h.b16 %v491
  %v585 = vunpack.c.l.b16 %v492
  %v586 = vunpack.c.h.b16 %v492
  %v587 = vunpack.c.l.b16 %v493
  %v588 = vunpack.c.h.b16 %v493
  %v589 = vunpack.c.l.b16 %v494
  %v590 = vunpack.c.h.b16 %v494
  %v591 = vunpack.c.l.b16 %v495
  %v592 = vunpack.c.h.b16 %v495
  %v593 = vunpack.c.l.b16 %v496
  %v594 = vunpack.c.h.b16 %v496
  %v595 = vunpack.c.l.b16 %v497
  %v596 = vunpack.c.h.b16 %v497
  %v597 = vunpack.c.l.b16 %v498
  %v598 = vunpack.c.h.b16 %v498
  %v599 = vunpack.c.l.b16 %v499
  %v600 = vunpack.c.h.b16 %v499
  %v601 = vunpack.c.l.b16 %v500
  %v602 = vunpack.c.h.b16 %v500
  %v603 = vunpack.c.l.b16 %v501
  %v604 = vunpack.c.h.b16 %v501
  %v605 = vunpack.c.l.b16 %v502
  %v606 = vunpack.c.h.b16 %v502
  %v607 = vunpack.c.l.b16 %v503
  %v608 = vunpack.c.h.b16 %v503
  %v609 = vunpack.c.l.b16 %v504
  %v610 = vunpack.c.h.b16 %v504
  %v611 = vunpack.c.l.b16 %v505
  %v612 = vunpack.c.h.b16 %v505
  %v613 = vunpack.c.l.b16 %v506
  %v614 = vunpack.c.h.b16 %v506
  %v615 = vpack.c.b16 %v553, %v551
  %v616 = vpack.c.b16 %v554, %v552
  %v617 = vpack.c.b16 %v557, %v555
  %v618 = vpack.c.b16 %v558, %v556
  %v619 = vpack.c.b16 %v561, %v559
  %v620 = vpack.c.b16 %v562, %v560
  %v621 = vpack.c.b16 %v565, %v563
  %v622 = vpack.c.b16 %v566, %v564
  %v623 = vpack.c.b16 %v569, %v567
  %v624 = vpack.c.b16 %v570, %v568
  %v625 = vpack.c.b16 %v573, %v571
  %v626 = vpack.c.b16 %v574, %v572
  %v627 = vpack.c.b16 %v577, %v575
  %v628 = vpack.c.b16 %v578, %v576
  %v629 = vpack.c.b16 %v581, %v579
  %v630 = vpack.c.b16 %v582, %v580
  %v631 = vpack.c.b16 %v585, %v583
  %v632 = vpack.c.b16 %v586, %v584
  %v633 = vpack.c.b16 %v589, %v587
  %v634 = vpack.c.b16 %v590, %v588
  %v635 = vpack.c.b16 %v593, %v591
  %v636 = vpack.c.b16 %v594, %v592
  %v637 = vpack.c.b16 %v597, %v595
  %v638 = vpack.c.b16 %v598, %v596
  %v639 = vpack.c.b16 %v601, %v599
  %v640 = vpack.c.b16 %v602, %v600
  %v641 = vpack.c.b16 %v605, %v603
  %v642 = vpack.c.b16 %v606, %v604
  %v643 = vpack.c.b16 %v609, %v607
  %v644 = vpack.c.b16 %v610, %v608
  %v645 = vpack.c.b16 %v613, %v611
  %v646 = vpack.c.b16 %v614, %v612
  %679 = vmatprep.subr.bf16.mxu0 %v630
  %680 = vmatpush1.bf16.msra.mxu0 %v629
  %681 = vmatprep.subr.bf16.mxu0 %v628
  %682 = vmatpush1.bf16.msra.mxu0 %v627
  %683 = vmatprep.subr.bf16.mxu0 %v626
  %684 = vmatpush1.bf16.msra.mxu0 %v625
  %685 = vmatprep.subr.bf16.mxu0 %v624
  %686 = vmatpush1.bf16.msra.mxu0 %v623
  %687 = vmatprep.subr.bf16.mxu0 %v622
  %688 = vmatpush1.bf16.msra.mxu0 %v621
  %689 = vmatprep.subr.bf16.mxu0 %v620
  %690 = vmatpush1.bf16.msra.mxu0 %v619
  %691 = vmatprep.subr.bf16.mxu0 %v618
  %692 = vmatpush1.bf16.msra.mxu0 %v617
  %693 = vmatprep.subr.bf16.mxu0 %v616
  %694 = vmatpush1.bf16.msra.mxu0 %v615
  %695 = vmatprep.subr.bf16.mxu0 %v646
  %696 = vmatpush2.bf16.msra.mxu0 %v645
  %697 = vmatprep.subr.bf16.mxu0 %v644
  %698 = vmatpush2.bf16.msra.mxu0 %v643
  %699 = vmatprep.subr.bf16.mxu0 %v642
  %700 = vmatpush2.bf16.msra.mxu0 %v641
  %701 = vmatprep.subr.bf16.mxu0 %v640
  %702 = vmatpush2.bf16.msra.mxu0 %v639
  %703 = vmatprep.subr.bf16.mxu0 %v638
  %704 = vmatpush2.bf16.msra.mxu0 %v637
  %705 = vmatprep.subr.bf16.mxu0 %v636
  %706 = vmatpush2.bf16.msra.mxu0 %v635
  %707 = vmatprep.subr.bf16.mxu0 %v634
  %708 = vmatpush2.bf16.msra.mxu0 %v633
  %709 = vmatprep.subr.bf16.mxu0 %v632
  %710 = vmatpush2.bf16.msra.mxu0 %v631
  %711 = vmatprep.mubr.bf16.mxu0 %v460
  %712 = vmatmul.mubr.bf16.gmra.mxu0 %v459
  %v713 = vpop.f32.mrf.mxu0
  %v714 = vadd.f32 %v512, %v713
  %v715 = vpop.f32.mrf.mxu0
  %v716 = vadd.f32 %v516, %v715
  %v717 = vpop.f32.mrf.mxu0
  %v718 = vadd.f32 %v512, %v717
  %v719 = vpop.f32.mrf.mxu0
  %v720 = vadd.f32 %v516, %v719
  %721 = vmatprep.mubr.bf16.mxu0 %v462
  %722 = vmatmul.mubr.bf16.gmra.mxu0 %v461
  %v723 = vpop.f32.mrf.mxu0
  %v724 = vadd.f32 %v512, %v723
  %v725 = vpop.f32.mrf.mxu0
  %v726 = vadd.f32 %v516, %v725
  %v727 = vpop.f32.mrf.mxu0
  %v728 = vadd.f32 %v512, %v727
  %v729 = vpop.f32.mrf.mxu0
  %v730 = vadd.f32 %v516, %v729
  %731 = vmatprep.mubr.bf16.mxu0 %v464
  %732 = vmatmul.mubr.bf16.gmra.mxu0 %v463
  %v733 = vpop.f32.mrf.mxu0
  %v734 = vadd.f32 %v512, %v733
  %v735 = vpop.f32.mrf.mxu0
  %v736 = vadd.f32 %v516, %v735
  %v737 = vpop.f32.mrf.mxu0
  %v738 = vadd.f32 %v512, %v737
  %v739 = vpop.f32.mrf.mxu0
  %v740 = vadd.f32 %v516, %v739
  %741 = vmatprep.mubr.bf16.mxu0 %v466
  %742 = vmatmul.mubr.bf16.gmra.mxu0 %v465
  %v743 = vpop.f32.mrf.mxu0
  %v744 = vadd.f32 %v512, %v743
  %v745 = vpop.f32.mrf.mxu0
  %v746 = vadd.f32 %v516, %v745
  %v747 = vpop.f32.mrf.mxu0
  %v748 = vadd.f32 %v512, %v747
  %v749 = vpop.f32.mrf.mxu0
  %v750 = vadd.f32 %v516, %v749
  %751 = vmatprep.mubr.bf16.mxu0 %v468
  %752 = vmatmul.mubr.bf16.gmra.mxu0 %v467
  %v753 = vpop.f32.mrf.mxu0
  %v754 = vadd.f32 %v512, %v753
  %v755 = vpop.f32.mrf.mxu0
  %v756 = vadd.f32 %v516, %v755
  %v757 = vpop.f32.mrf.mxu0
  %v758 = vadd.f32 %v512, %v757
  %v759 = vpop.f32.mrf.mxu0
  %v760 = vadd.f32 %v516, %v759
  %761 = vmatprep.mubr.bf16.mxu0 %v470
  %762 = vmatmul.mubr.bf16.gmra.mxu0 %v469
  %v763 = vpop.f32.mrf.mxu0
  %v764 = vadd.f32 %v512, %v763
  %v765 = vpop.f32.mrf.mxu0
  %v766 = vadd.f32 %v516, %v765
  %v767 = vpop.f32.mrf.mxu0
  %v768 = vadd.f32 %v512, %v767
  %v769 = vpop.f32.mrf.mxu0
  %v770 = vadd.f32 %v516, %v769
  %771 = vmatprep.mubr.bf16.mxu0 %v472
  %772 = vmatmul.mubr.bf16.gmra.mxu0 %v471
  %v773 = vpop.f32.mrf.mxu0
  %v774 = vadd.f32 %v512, %v773
  %v775 = vpop.f32.mrf.mxu0
  %v776 = vadd.f32 %v516, %v775
  %v777 = vpop.f32.mrf.mxu0
  %v778 = vadd.f32 %v512, %v777
  %v779 = vpop.f32.mrf.mxu0
  %v780 = vadd.f32 %v516, %v779
  %781 = vmatprep.mubr.bf16.mxu0 %v474
  %782 = vmatmul.mubr.bf16.gmra.mxu0 %v473
  %v783 = vpop.f32.mrf.mxu0
  %v784 = vadd.f32 %v512, %v783
  %v785 = vpop.f32.mrf.mxu0
  %v786 = vadd.f32 %v516, %v785
  %v787 = vpop.f32.mrf.mxu0
  %v788 = vadd.f32 %v512, %v787
  %v789 = vpop.f32.mrf.mxu0
  %v790 = vadd.f32 %v516, %v789
  %791 = vdwg.mxu0
  %v792 = vmax.f32 %v714, 0.0
  %v793 = vmax.f32 %v716, 0.0
  %v794 = vmax.f32 %v718, 0.0
  %v795 = vmax.f32 %v720, 0.0
  %v796 = vmax.f32 %v724, 0.0
  %v797 = vmax.f32 %v726, 0.0
  %v798 = vmax.f32 %v728, 0.0
  %v799 = vmax.f32 %v730, 0.0
  %v800 = vmax.f32 %v734, 0.0
  %v801 = vmax.f32 %v736, 0.0
  %v802 = vmax.f32 %v738, 0.0
  %v803 = vmax.f32 %v740, 0.0
  %v804 = vmax.f32 %v744, 0.0
  %v805 = vmax.f32 %v746, 0.0
  %v806 = vmax.f32 %v748, 0.0
  %v807 = vmax.f32 %v750, 0.0
  %v808 = vmax.f32 %v754, 0.0
  %v809 = vmax.f32 %v756, 0.0
  %v810 = vmax.f32 %v758, 0.0
  %v811 = vmax.f32 %v760, 0.0
  %v812 = vmax.f32 %v764, 0.0
  %v813 = vmax.f32 %v766, 0.0
  %v814 = vmax.f32 %v768, 0.0
  %v815 = vmax.f32 %v770, 0.0
  %v816 = vmax.f32 %v774, 0.0
  %v817 = vmax.f32 %v776, 0.0
  %v818 = vmax.f32 %v778, 0.0
  %v819 = vmax.f32 %v780, 0.0
  %v820 = vmax.f32 %v784, 0.0
  %v821 = vmax.f32 %v786, 0.0
  %v822 = vmax.f32 %v788, 0.0
  %v823 = vmax.f32 %v790, 0.0
  %v824 = vld [vmem:[%s7] sm:$0x3]
  %v826 = vlaneseq
  %v827 = vshrl.u32 %v826, 7
  %v828 = vsub.s32 0, %v827
  %v829 = vrot.slane %v824, %v828
  %v830 = vlaneseq
  %v831 = vshrl.u32 %v830, 7
  %v832 = vsub.s32 1, %v831
  %v833 = vrot.slane %v824, %v832
  %v836 = vmul.f32 %v792, %v829
  %v837 = vmul.f32 %v793, %v833
  %v838 = vmul.f32 %v794, %v829
  %v839 = vmul.f32 %v795, %v833
  %v840 = vmul.f32 %v796, %v829
  %v841 = vmul.f32 %v797, %v833
  %v842 = vmul.f32 %v798, %v829
  %v843 = vmul.f32 %v799, %v833
  %v844 = vmul.f32 %v800, %v829
  %v845 = vmul.f32 %v801, %v833
  %v846 = vmul.f32 %v802, %v829
  %v847 = vmul.f32 %v803, %v833
  %v848 = vmul.f32 %v804, %v829
  %v849 = vmul.f32 %v805, %v833
  %v850 = vmul.f32 %v806, %v829
  %v851 = vmul.f32 %v807, %v833
  %v852 = vmul.f32 %v808, %v829
  %v853 = vmul.f32 %v809, %v833
  %v854 = vmul.f32 %v810, %v829
  %v855 = vmul.f32 %v811, %v833
  %v856 = vmul.f32 %v812, %v829
  %v857 = vmul.f32 %v813, %v833
  %v858 = vmul.f32 %v814, %v829
  %v859 = vmul.f32 %v815, %v833
  %v860 = vmul.f32 %v816, %v829
  %v861 = vmul.f32 %v817, %v833
  %v862 = vmul.f32 %v818, %v829
  %v863 = vmul.f32 %v819, %v833
  %v864 = vmul.f32 %v820, %v829
  %v865 = vmul.f32 %v821, %v833
  %v866 = vmul.f32 %v822, %v829
  %v867 = vmul.f32 %v823, %v833
  %v868 = vadd.f32 %v836, %v837
  %869 = vadd.xlane.f32.xlu0 %v868
  %v870 = vpop.xlane.xlu0 %869
  %v871 = vadd.f32 %v838, %v839
  %872 = vadd.xlane.f32.xlu0 %v871
  %v873 = vpop.xlane.xlu0 %872
  %v874 = vadd.f32 %v840, %v841
  %875 = vadd.xlane.f32.xlu0 %v874
  %v876 = vpop.xlane.xlu0 %875
  %v877 = vadd.f32 %v842, %v843
  %878 = vadd.xlane.f32.xlu0 %v877
  %v879 = vpop.xlane.xlu0 %878
  %v880 = vadd.f32 %v844, %v845
  %881 = vadd.xlane.f32.xlu0 %v880
  %v882 = vpop.xlane.xlu0 %881
  %v883 = vadd.f32 %v846, %v847
  %884 = vadd.xlane.f32.xlu0 %v883
  %v885 = vpop.xlane.xlu0 %884
  %v886 = vadd.f32 %v848, %v849
  %887 = vadd.xlane.f32.xlu0 %v886
  %v888 = vpop.xlane.xlu0 %887
  %v889 = vadd.f32 %v850, %v851
  %890 = vadd.xlane.f32.xlu0 %v889
  %v891 = vpop.xlane.xlu0 %890
  %v892 = vadd.f32 %v852, %v853
  %893 = vadd.xlane.f32.xlu0 %v892
  %v894 = vpop.xlane.xlu0 %893
  %v895 = vadd.f32 %v854, %v855
  %896 = vadd.xlane.f32.xlu0 %v895
  %v897 = vpop.xlane.xlu0 %896
  %v898 = vadd.f32 %v856, %v857
  %899 = vadd.xlane.f32.xlu0 %v898
  %v900 = vpop.xlane.xlu0 %899
  %v901 = vadd.f32 %v858, %v859
  %902 = vadd.xlane.f32.xlu0 %v901
  %v903 = vpop.xlane.xlu0 %902
  %v904 = vadd.f32 %v860, %v861
  %905 = vadd.xlane.f32.xlu0 %v904
  %v906 = vpop.xlane.xlu0 %905
  %v907 = vadd.f32 %v862, %v863
  %908 = vadd.xlane.f32.xlu0 %v907
  %v909 = vpop.xlane.xlu0 %908
  %v910 = vadd.f32 %v864, %v865
  %911 = vadd.xlane.f32.xlu0 %v910
  %v912 = vpop.xlane.xlu0 %911
  %v913 = vadd.f32 %v866, %v867
  %914 = vadd.xlane.f32.xlu0 %v913
  %v915 = vpop.xlane.xlu0 %914
  %s916 = sld [smem:[#allocation2]]
  %v917 = vstv %s916
  %v918 = vadd.f32 %v870, %v917
  %v919 = vadd.f32 %v873, %v917
  %v920 = vadd.f32 %v876, %v917
  %v921 = vadd.f32 %v879, %v917
  %v922 = vadd.f32 %v882, %v917
  %v923 = vadd.f32 %v885, %v917
  %v924 = vadd.f32 %v888, %v917
  %v925 = vadd.f32 %v891, %v917
  %v926 = vadd.f32 %v894, %v917
  %v927 = vadd.f32 %v897, %v917
  %v928 = vadd.f32 %v900, %v917
  %v929 = vadd.f32 %v903, %v917
  %v930 = vadd.f32 %v906, %v917
  %v931 = vadd.f32 %v909, %v917
  %v932 = vadd.f32 %v912, %v917
  %v933 = vadd.f32 %v915, %v917
  %v950 = vlaneseq
  %v951 = vand.u32 %v950, 127
  %v952 = vlaneseq
  %v953 = vshrl.u32 %v952, 7
  %v954 = vsub.s32 %v951, %v953
  %v955 = vrot.slane %v918, %v954
  %v956 = vadd.s32 %v951, 4294967288
  %v957 = vlaneseq
  %v958 = vshrl.u32 %v957, 7
  %v959 = vsub.s32 %v956, %v958
  %v960 = vrot.slane %v919, %v959
  %vm961 = vcmask 130112
  %v962 = vsel %vm961, %v960, %v955
  %v963 = vadd.s32 %v951, 4294967280
  %v964 = vlaneseq
  %v965 = vshrl.u32 %v964, 7
  %v966 = vsub.s32 %v963, %v965
  %v967 = vrot.slane %v920, %v966
  %vm968 = vcmask 195712
  %v969 = vsel %vm968, %v967, %v962
  %v970 = vadd.s32 %v951, 4294967272
  %v971 = vlaneseq
  %v972 = vshrl.u32 %v971, 7
  %v973 = vsub.s32 %v970, %v972
  %v974 = vrot.slane %v921, %v973
  %vm975 = vcmask 261312
  %v976 = vsel %vm975, %v974, %v969
  %v977 = vadd.s32 %v951, 4294967264
  %v978 = vlaneseq
  %v979 = vshrl.u32 %v978, 7
  %v980 = vsub.s32 %v977, %v979
  %v981 = vrot.slane %v922, %v980
  %vm982 = vcmask 326912
  %v983 = vsel %vm982, %v981, %v976
  %v984 = vadd.s32 %v951, 4294967256
  %v985 = vlaneseq
  %v986 = vshrl.u32 %v985, 7
  %v987 = vsub.s32 %v984, %v986
  %v988 = vrot.slane %v923, %v987
  %vm989 = vcmask 392512
  %v990 = vsel %vm989, %v988, %v983
  %v991 = vadd.s32 %v951, 4294967248
  %v992 = vlaneseq
  %v993 = vshrl.u32 %v992, 7
  %v994 = vsub.s32 %v991, %v993
  %v995 = vrot.slane %v924, %v994
  %vm996 = vcmask 458112
  %v997 = vsel %vm996, %v995, %v990
  %v998 = vadd.s32 %v951, 4294967240
  %v999 = vlaneseq
  %v1000 = vshrl.u32 %v999, 7
  %v1001 = vsub.s32 %v998, %v1000
  %v1002 = vrot.slane %v925, %v1001
  %vm1003 = vcmask 523712
  %v1004 = vsel %vm1003, %v1002, %v997
  %v1005 = vadd.s32 %v951, 4294967232
  %v1006 = vlaneseq
  %v1007 = vshrl.u32 %v1006, 7
  %v1008 = vsub.s32 %v1005, %v1007
  %v1009 = vrot.slane %v926, %v1008
  %vm1010 = vcmask 589312
  %v1011 = vsel %vm1010, %v1009, %v1004
  %v1012 = vadd.s32 %v951, 4294967224
  %v1013 = vlaneseq
  %v1014 = vshrl.u32 %v1013, 7
  %v1015 = vsub.s32 %v1012, %v1014
  %v1016 = vrot.slane %v927, %v1015
  %vm1017 = vcmask 654912
  %v1018 = vsel %vm1017, %v1016, %v1011
  %v1019 = vadd.s32 %v951, 4294967216
  %v1020 = vlaneseq
  %v1021 = vshrl.u32 %v1020, 7
  %v1022 = vsub.s32 %v1019, %v1021
  %v1023 = vrot.slane %v928, %v1022
  %vm1024 = vcmask 720512
  %v1025 = vsel %vm1024, %v1023, %v1018
  %v1026 = vadd.s32 %v951, 4294967208
  %v1027 = vlaneseq
  %v1028 = vshrl.u32 %v1027, 7
  %v1029 = vsub.s32 %v1026, %v1028
  %v1030 = vrot.slane %v929, %v1029
  %vm1031 = vcmask 786112
  %v1032 = vsel %vm1031, %v1030, %v1025
  %v1033 = vadd.s32 %v951, 4294967200
  %v1034 = vlaneseq
  %v1035 = vshrl.u32 %v1034, 7
  %v1036 = vsub.s32 %v1033, %v1035
  %v1037 = vrot.slane %v930, %v1036
  %vm1038 = vcmask 851712
  %v1039 = vsel %vm1038, %v1037, %v1032
  %v1040 = vadd.s32 %v951, 4294967192
  %v1041 = vlaneseq
  %v1042 = vshrl.u32 %v1041, 7
  %v1043 = vsub.s32 %v1040, %v1042
  %v1044 = vrot.slane %v931, %v1043
  %vm1045 = vcmask 917312
  %v1046 = vsel %vm1045, %v1044, %v1039
  %v1047 = vadd.s32 %v951, 4294967184
  %v1048 = vlaneseq
  %v1049 = vshrl.u32 %v1048, 7
  %v1050 = vsub.s32 %v1047, %v1049
  %v1051 = vrot.slane %v932, %v1050
  %vm1052 = vcmask 982912
  %v1053 = vsel %vm1052, %v1051, %v1046
  %v1054 = vadd.s32 %v951, 4294967176
  %v1055 = vlaneseq
  %v1056 = vshrl.u32 %v1055, 7
  %v1057 = vsub.s32 %v1054, %v1056
  %v1058 = vrot.slane %v933, %v1057
  %vm1059 = vcmask 1048512
  %v1060 = vsel %vm1059, %v1058, %v1053
  %1062 = vst [vmem:[%s9] sm:$0x1] %v1060
  // Predicated region
  $region38: #{sac_critic_forward.1} parent=0 // pred_check
    _
  $region39: #{sac_critic_forward.1} parent=0 // pred_check_branch
    %1064 = sbr.rel (0) target = $region41
  $region40: #{sac_critic_forward.1} parent=0 // pred_region
    _
  $region41: #{sac_critic_forward.1} parent=0 // pred_fallthru
    _
  // Predicated region
  $region42: #{sac_critic_forward.1} parent=0 // pred_check
    _
  $region43: #{sac_critic_forward.1} parent=0 // pred_check_branch
    %1066 = sbr.rel (0) target = $region45
  $region44: #{sac_critic_forward.1} parent=0 // pred_region
    _
  $region45: #{sac_critic_forward.1} parent=0 // pred_fallthru
    _

</llo_original>
